<compile_context>
chip_gen: v6e
topology: v6e:2x2x1
jax: 0.10.0
libtpu: 0.0.40
codegen_flags: <defaults>
</compile_context>

<pallas_src>
import functools

import numpy as np
import jax
import jax.numpy as jnp
from jax import lax
from jax.experimental import pallas as pl
from jax.experimental.pallas import tpu as pltpu

C1, C2 = 256, 128      # conv1 / conv2 output channels (fixed by the module)
EPS = 1e-5             # BatchNorm eps
LANES = 128            # vreg lane width; distance rows are padded to this
SLOT = 8               # per-batch contraction slot width (>= point dims + 2)

_ROLL_MATCHES_NUMPY = None


def _roll_matches_numpy() -> bool:
    """Probe pltpu.roll's rotate direction once (cached).

    The bitonic network needs "lane j reads lane j +/- s"; instead of
    hard-coding the hardware rotate direction we probe it with a trivial
    single-tile kernel and pick the shift amounts accordingly.
    """
    global _ROLL_MATCHES_NUMPY
    if _ROLL_MATCHES_NUMPY is None:
        def probe(x_ref, o_ref):
            o_ref[...] = pltpu.roll(x_ref[...], 1, axis=1)

        x = lax.broadcasted_iota(jnp.float32, (8, LANES), 1)
        r = pl.pallas_call(
            probe, out_shape=jax.ShapeDtypeStruct((8, LANES), jnp.float32))(x)
        # numpy convention: roll by +1 puts the last element first.
        _ROLL_MATCHES_NUMPY = bool(np.asarray(r)[0, 0] == LANES - 1)
    return _ROLL_MATCHES_NUMPY


def _classify1_kernel(a_ref, p_ref, w1_ref, b1_ref, w2_ref, b2w3_ref, o_ref,
                      *, n_points, roll_like_numpy):
    N = n_points                       # points per batch entry
    rows = a_ref.shape[1]              # BB * N conv rows in this grid step
    LW = p_ref.shape[2]                # lane-padded distance row width (=128)
    K = w1_ref.shape[0]                # knn k == conv1 input channels (=20)

    # ---- exact pairwise distances in ONE MXU dot.  The wrapper packed
    #        a[row, :]   = block-diag of [x_n | 1 | -||y_n||^2 | 0...]
    #        p[:, m]     = stacked      [2*y_m ; -||x_m||^2 ; 1 ; 0...]
    #      so d[n, m] = 2<x_n, y_m> - ||x_m||^2 - ||y_n||^2 (module formula).
    d = jnp.dot(a_ref[0], p_ref[0],
                preferred_element_type=jnp.float32)          # (rows, LW)

    lane = lax.broadcasted_iota(jnp.int32, (rows, LW), 1)
    d = jnp.where(lane < N, d, -jnp.inf)                     # mask padded lanes

    # ---- top-K (sorted descending) via a bitonic compare-exchange network on
    #      the lane axis; partner lanes (j ^ s) come from circular rotates that
    #      never wrap across a sort block for the lanes we care about.  Masks
    #      are recomputed per round from `lane` (cheap VALU) instead of being
    #      hoisted across all rounds (vreg pressure / spills).
    NP = 1
    while NP < N:                                            # pow2 >= N
        NP *= 2
    blk = 2
    while blk <= NP:
        s = blk // 2
        while s >= 1:
            bit_s = (lane & s) == 0
            fwd = (LW - s) if roll_like_numpy else s         # lane j reads j+s
            bwd = s if roll_like_numpy else (LW - s)         # lane j reads j-s
            partner = jnp.where(bit_s,
                                pltpu.roll(d, fwd, axis=1),
                                pltpu.roll(d, bwd, axis=1))
            # blocks with (j & blk) == 0 sort descending; within a pair the
            # lower lane ((j & s) == 0) keeps the max for a descending block.
            keep_max = ((lane & blk) == 0) == bit_s
            d = jnp.where(keep_max,
                          jnp.maximum(d, partner),
                          jnp.minimum(d, partner))
            s //= 2
        blk *= 2

    # ---- graph feature: k largest distances per row (sorted descending).
    feat = d[:, :K]                                          # (rows, K)

    # ---- 1x1 convs == matmuls over all rows; BN scale pre-folded into the
    #      weights (inference mode), only the shifts remain as adds.
    h1 = jnp.dot(feat, w1_ref[...], preferred_element_type=jnp.float32)
    h1 = jnp.maximum(h1 + b1_ref[...], 0.0)                  # (rows, 256)
    h2 = jnp.dot(h1, w2_ref[...], preferred_element_type=jnp.float32)
    h2 = jnp.maximum(h2 + b2w3_ref[0:1, :], 0.0)             # (rows, 128)
    # final 128 -> 1 conv as (1,128) x (rows,128)^T: lane-dense (1, rows) row.
    logit = lax.dot_general(b2w3_ref[1:2, :], h2, (((1,), (1,)), ((), ())),
                            preferred_element_type=jnp.float32)   # (1, rows)
    sig = 1.0 / (1.0 + jnp.exp(-logit))                      # sigmoid

    ow = o_ref.shape[2]
    if ow > rows:                                            # lane-dense store
        sig = jnp.concatenate(
            [sig, jnp.zeros((1, ow - rows), jnp.float32)], axis=1)
    o_ref[0] = sig


def classify1(x, y, params, *, batch_blocks=1):
    """x, y: (B, N, C) channels-last point clouds.  Returns (B, N, 1).

    batch_blocks=1 fully fuses the batch into one kernel step (best on the
    single-TensorCore v5e/v6e and also for small B on v7x); only raise it to
    2 on v7x once the per-core row count (B/2 * N) is >= ~256.
    """
    B, N, C = x.shape
    w1, s1, b1, w2, s2, b2, w3 = params
    K = w1.shape[0]
    if N > LANES:
        # TODO(synk): tile the distance rows over column blocks for large N.
        raise NotImplementedError("N > 128 requires column tiling")
    assert K <= N, "top-k needs k <= num_points"
    assert C + 2 <= SLOT
    G = batch_blocks
    assert B % G == 0, "batch_blocks must divide the batch"
    BB = B // G
    rows = BB * N
    OW = max(LANES, ((rows + LANES - 1) // LANES) * LANES)   # lane-dense out

    xf = x.astype(jnp.float32)
    yf = y.astype(jnp.float32)
    xnorm = jnp.sum(xf * xf, axis=-1)                        # (B, N) ||x_m||^2
    ynorm = jnp.sum(yf * yf, axis=-1)                        # (B, N) ||y_n||^2

    # Augmented lhs rows per batch: [x_n | 1 | -||y_n||^2 | 0...]  -> (B,N,SLOT)
    a = jnp.concatenate(
        [xf,
         jnp.ones((B, N, 1), jnp.float32),
         -ynorm[..., None],
         jnp.zeros((B, N, SLOT - C - 2), jnp.float32)], axis=-1)
    # Packed rhs per batch: [2*y^T ; -||x_m||^2 ; 1 ; 0...], lane-padded to 128.
    p = jnp.concatenate(
        [2.0 * jnp.transpose(yf, (0, 2, 1)),
         -xnorm[:, None, :],
         jnp.ones((B, 1, N), jnp.float32),
         jnp.zeros((B, SLOT - C - 2, N), jnp.float32)], axis=1)
    p = jnp.pad(p, ((0, 0), (0, 0), (0, LANES - N)))         # (B, SLOT, 128)

    # Block-diagonal lhs / stacked rhs per grid step so ONE 2-D MXU dot covers
    # all BB batch entries (layout plumbing only, done host-side).
    a_g = a.reshape(G, BB, N, SLOT)
    p_g = p.reshape(G, BB, SLOT, LANES)
    a_bd = jnp.zeros((G, rows, BB * SLOT), jnp.float32)
    for b in range(BB):
        a_bd = a_bd.at[:, b * N:(b + 1) * N,
                       b * SLOT:(b + 1) * SLOT].set(a_g[:, b])
    p_stk = p_g.reshape(G, BB * SLOT, LANES)

    # Fold BN scales into the conv weights (inference mode); stack the two
    # remaining (1,128) row params into a single operand.
    w1f = (w1 * s1).astype(jnp.float32)                      # (K, 256)
    w2f = (w2 * s2).astype(jnp.float32)                      # (256, 128)
    b1r = b1.reshape(1, -1).astype(jnp.float32)              # (1, 256)
    b2w3 = jnp.concatenate([b2.reshape(1, -1).astype(jnp.float32),
                            w3.reshape(1, -1).astype(jnp.float32)],
                           axis=0)                           # (2, 128)

    kernel = functools.partial(_classify1_kernel, n_points=N,
                               roll_like_numpy=_roll_matches_numpy())
    out = pl.pallas_call(
        kernel,
        out_shape=jax.ShapeDtypeStruct((G, 1, OW), jnp.float32),
        grid_spec=pltpu.PrefetchScalarGridSpec(
            num_scalar_prefetch=0,
            grid=(G,),
            in_specs=[
                pl.BlockSpec((1, rows, BB * SLOT), lambda g: (g, 0, 0)),
                pl.BlockSpec((1, BB * SLOT, LANES), lambda g: (g, 0, 0)),
                pl.BlockSpec(w1f.shape, lambda g: (0, 0)),
                pl.BlockSpec(b1r.shape, lambda g: (0, 0)),
                pl.BlockSpec(w2f.shape, lambda g: (0, 0)),
                pl.BlockSpec(b2w3.shape, lambda g: (0, 0)),
            ],
            out_specs=pl.BlockSpec((1, 1, OW), lambda g: (g, 0, 0)),
        ),
        compiler_params=pltpu.CompilerParams(
            dimension_semantics=("parallel",)),
    )(a_bd, p_stk, w1f, b1r, w2f, b2w3)
    return out[:, 0, :rows].reshape(B, N, 1)


def reference(x, y, params, k):
    """Pure-JAX replica of the PyTorch forward (inference-mode BN)."""
    w1, s1, b1, w2, s2, b2, w3 = params
    # knn_cross with the module's (quirky) broadcast semantics:
    #   pd[b, n, m] = -||x_m||^2 + 2<x_n, y_m> - ||y_n||^2
    inner = jnp.sum(x[:, :, None, :] * y[:, None, :, :], axis=-1)   # <x_n,y_m>
    xx = jnp.sum(x * x, axis=-1)                                    # ||x_n||^2
    yy = jnp.sum(y * y, axis=-1)                                    # ||y_n||^2
    pd = 2.0 * inner - xx[:, None, :] - yy[:, :, None]
    dist = lax.top_k(pd, k)[0]                          # (B, N, k), sorted desc
    h1 = jnp.maximum(jnp.einsum('bnk,ko->bno', dist, w1) * s1 + b1, 0.0)
    h2 = jnp.maximum(jnp.einsum('bno,op->bnp', h1, w2) * s2 + b2, 0.0)
    return jax.nn.sigmoid(jnp.einsum('bnp,pq->bnq', h2, w3))


if __name__ == "__main__":
    B, N, C, K = 2, 32, 3, 20       # K == emb_dims == knn k (module default)
    key = jax.random.PRNGKey(0)
    k1, k2, k3, k4, k5, k6, k7, k8, k9 = jax.random.split(key, 9)

    x = jax.random.normal(k1, (B, N, C), jnp.float32)
    y = jax.random.normal(k2, (B, N, C), jnp.float32)

    # conv weights stored transposed so the kernel does feat @ W^T as feat @ w
    w1 = 0.1 * jax.random.normal(k3, (K,  C1), jnp.float32)   # conv1: 20 -> 256
    w2 = 0.1 * jax.random.normal(k4, (C1, C2), jnp.float32)   # conv2: 256 -> 128
    w3 = 0.1 * jax.random.normal(k5, (C2, 1),  jnp.float32)   # conv3: 128 -> 1

    # BatchNorm params (deterministic), folded into scale/shift (eval mode)
    g1 = 1.0 + 0.1 * jax.random.normal(k6, (1, C1), jnp.float32)
    be1 = 0.1 * jax.random.normal(k7, (1, C1), jnp.float32)
    g2 = 1.0 + 0.1 * jax.random.normal(k8, (1, C2), jnp.float32)
    be2 = 0.1 * jax.random.normal(k9, (1, C2), jnp.float32)
    rm1, rv1 = jnp.zeros((1, C1)), jnp.ones((1, C1))
    rm2, rv2 = jnp.zeros((1, C2)), jnp.ones((1, C2))
    s1 = g1 / jnp.sqrt(rv1 + EPS); b1 = be1 - rm1 * s1
    s2 = g2 / jnp.sqrt(rv2 + EPS); b2 = be2 - rm2 * s2

    params = (w1, s1, b1, w2, s2, b2, w3)

    out = jax.block_until_ready(classify1(x, y, params))
    ref = reference(x, y, params, K)

    assert out.shape == (B, N, 1)
    np.testing.assert_allclose(np.asarray(out), np.asarray(ref),
                               rtol=5e-4, atol=1e-4)
    print("KERNEL_OK")
</pallas_src>

<mosaic_0001>
module attributes {stable_mosaic.version = 11 : i64} {
  func.func @probe(%arg0: memref<8x128xf32, #tpu.memory_space<vmem>>, %arg1: memref<8x128xf32, #tpu.memory_space<vmem>>) attributes {dimension_semantics = [], scalar_prefetch = 0 : i64, scratch_operands = 0 : i64, tpu.core_type = #tpu.core_type<tc>} {
    %c0 = arith.constant 0 : index
    %c0_0 = arith.constant 0 : index
    %0 = vector.load %arg0[%c0, %c0_0] : memref<8x128xf32, #tpu.memory_space<vmem>>, vector<8x128xf32>
    %c1_i32 = arith.constant 1 : i32
    %1 = tpu.dynamic_rotate %0 by %c1_i32 dim 1 : vector<8x128xf32>, i32 -> vector<8x128xf32>
    %c0_1 = arith.constant 0 : index
    %c0_2 = arith.constant 0 : index
    %2 = vector.load %arg1[%c0_1, %c0_2] : memref<8x128xf32, #tpu.memory_space<vmem>>, vector<8x128xf32>
    tpu.vector_store %arg1[%c0_1, %c0_2], %1 {strides = array<i32>} : memref<8x128xf32, #tpu.memory_space<vmem>>, vector<8x128xf32>,
    return
  }
}

</mosaic_0001>

<llo_original>
// kernel: tpu_custom_call.1
$region0: #{tpu_custom_call.1}
  #allocation0 [shape = 'u32[]', space=smem, size = 0x4, offset = 0x4, fixed_abs, tag = 'smem constant byte address 0x4 - core index']
  #allocation1 [shape = 'u32[144,128]{1,0:T(1,128)}', space=vmem, size = 0x12000, scoped, tag = 'internal scratch']
  %s0 = inlined_call_operand.hbm [shape: f32[8,128], index: 0, kind: input, shape index: {}]
  %s1 = inlined_call_operand.hbm [shape: f32[8,128], index: 1, kind: output, shape index: {}]
  %s2 = sld [smem:[#allocation0]]
  $region18: #{tpu_custom_call.1} parent=0
    _
  %s4 = ssub.s32 1, %s2
  %s5 = scalar_select 0, %s4, %s2
  $region1: #{tpu_custom_call.1} parent=0
    #allocation2 [shape = 'u8[4096]{0}', space=vmem, size = 0x1000, scoped, tag = 'input window, operand 0, single buffered']
    #allocation3 [shape = 's32[1]{0}', space=sflag, size = 0x4, scoped, tag = 'scoped memory for tpu_custom_call.1']
    #allocation4 [shape = 's32[1]{0}', space=sflag, size = 0x4, scoped, tag = 'scoped memory for tpu_custom_call.1']
    #allocation5 [shape = 'u8[4096]{0}', space=vmem, size = 0x1000, scoped, tag = 'output window, operand 0, single buffered']
    %6 = vsyncpa [#allocation3], 0
    %7 = vsyncpa [#allocation4], 0
    // Predicated region
    $region2: #{tpu_custom_call.1} parent=1 // pred_check
      _
    $region3: #{tpu_custom_call.1} parent=1 // pred_check_branch
      %9 = sbr.rel (0) target = $region5
    $region4: #{tpu_custom_call.1} parent=1 // pred_region
      %s11 = ssub.s32 128, 128
      %12 = vsyncadd [#allocation3], %s11
      %s14 = sshll.u32 [#allocation2], 4
      %s15 = int_to_ptr.vmem [resolvable:$true] %s14
      %17 = dma.hbm_to_vmem [thread:$0]  %s0, 128, %s15, [#allocation3]
    $region5: #{tpu_custom_call.1} parent=1 // pred_fallthru
      _
    // Predicated region
    $region6: #{tpu_custom_call.1} parent=1 // pred_check
      _
    $region7: #{tpu_custom_call.1} parent=1 // pred_check_branch
      %19 = sbr.rel (0) target = $region9
    $region8: #{tpu_custom_call.1} parent=1 // pred_region
      %20 = dma.done [#allocation3], 128
    $region9: #{tpu_custom_call.1} parent=1 // pred_fallthru
      _
    %v21 = vld [vmem:[#allocation2] sm:$0xff]
    %22 = vrot.lane.b32.xlu0 %v21, 1
    %v23 = vpop.permute.xlu0 %22
    %24 = vst [vmem:[#allocation5] sm:$0xff] %v23
    // Predicated region
    $region10: #{tpu_custom_call.1} parent=1 // pred_check
      _
    $region11: #{tpu_custom_call.1} parent=1 // pred_check_branch
      %26 = sbr.rel (0) target = $region13
    $region12: #{tpu_custom_call.1} parent=1 // pred_region
      %s28 = ssub.s32 128, 128
      %29 = vsyncadd [#allocation4], %s28
      %s31 = sshll.u32 [#allocation5], 4
      %s32 = int_to_ptr.vmem [resolvable:$true] %s31
      %34 = dma.vmem_to_hbm [thread:$0]  %s32, 128, %s1, [#allocation4]
    $region13: #{tpu_custom_call.1} parent=1 // pred_fallthru
      _
    // Predicated region
    $region14: #{tpu_custom_call.1} parent=1 // pred_check
      _
    $region15: #{tpu_custom_call.1} parent=1 // pred_check_branch
      %36 = sbr.rel (0) target = $region17
    $region16: #{tpu_custom_call.1} parent=1 // pred_region
      %37 = dma.done [#allocation4], 128
    $region17: #{tpu_custom_call.1} parent=1 // pred_fallthru
      _
    %38 = vsyncpa [#allocation3], 1
    %39 = vsyncpa [#allocation4], 1

</llo_original>
